<compile_context>
chip_gen: v7x
topology: tpu7x:2x2x1
jax: 0.10.0
libtpu: 0.0.40
codegen_flags: <defaults>
</compile_context>

<pallas_src>
import numpy as np
import jax
import jax.numpy as jnp
from jax.experimental import pallas as pl
from jax.experimental.pallas import tpu as pltpu


def _fitness_kernel(d_ref, pop_ref, fit_ref):
    f32 = jnp.float32
    D = d_ref[...].astype(f32)               # (N, N) distance matrix
    popf = pop_ref[...].astype(f32)           # (P, N) tours; node ids as exact small floats
    N = D.shape[0]
    P = popf.shape[0]
    PE = P * N                                # flattened (candidate, slot) edge axis
    L = fit_ref.shape[1]                      # lane-dense output width (>= P, mult of 128)

    # --- per-lane candidate / slot bookkeeping (iota + range compares only) ---------
    jl = jax.lax.broadcasted_iota(jnp.int32, (P, PE), 1)            # lane index j
    cs = jax.lax.broadcasted_iota(jnp.int32, (P, PE), 0)            # sublane candidate c'
    cand_sel = ((jl >= cs * N) & (jl < (cs + 1) * N)).astype(f32)   # [c' == j // N], (P, PE)

    cidx = jnp.sum(cs.astype(f32) * cand_sel, axis=0, keepdims=True)          # (1, PE)
    jl1 = jax.lax.broadcasted_iota(jnp.int32, (1, PE), 1).astype(f32)         # (1, PE)
    iidx = jl1 - f32(N) * cidx                                                # slot i(j), (1, PE)

    # --- slot-position selectors over the tour axis ----------------------------------
    r_n = jax.lax.broadcasted_iota(jnp.int32, (N, PE), 0).astype(f32)         # (N, PE)
    pos_src = (r_n == iidx).astype(f32)           # [r == i(j)]
    pos_dst = (r_n == iidx + 1.0).astype(f32)     # [r == i(j)+1] (never matches at slot N-1)

    # --- gather the (src, dst) node ids of every edge of every candidate (batched) ---
    src_all = jnp.dot(popf, pos_src, preferred_element_type=f32)    # (P, PE): pop[c', i(j)]
    dst_all = jnp.dot(popf, pos_dst, preferred_element_type=f32)    # (P, PE): pop[c', i(j)+1]
    src = jnp.sum(cand_sel * src_all, axis=0, keepdims=True)        # (1, PE) = pop[c(j), i(j)]
    dst = jnp.sum(cand_sel * dst_all, axis=0, keepdims=True)        # (1, PE) = pop[c(j), i(j)+1]

    # --- ONE batched distance gather on the MXU --------------------------------------
    row_sel = (r_n == src).astype(f32)                              # (N, PE): [a == src_j]
    col_sel = (r_n == dst).astype(f32)                              # (N, PE): [b == dst_j]
    m1 = jnp.dot(D, col_sel, preferred_element_type=f32)            # (N, PE): D[a, dst_j]

    # collapse the node axis first, then mask the invalid slot N-1 on the thin row
    valid = (iidx < f32(N - 1)).astype(f32)                         # (1, PE)
    edge = jnp.sum(row_sel * m1, axis=0, keepdims=True) * valid     # (1, PE): D[src_j, dst_j]

    # --- per-candidate segment sum: one thin matmul, lane-dense result ---------------
    js = jax.lax.broadcasted_iota(jnp.int32, (PE, L), 0)
    cl = jax.lax.broadcasted_iota(jnp.int32, (PE, L), 1)
    seg = ((js >= cl * N) & (js < (cl + 1) * N)).astype(f32)        # (PE, L); cols >= P are 0
    costs = jnp.dot(edge, seg, preferred_element_type=f32)          # (1, L)

    # distance_metric[-1, 0] wrap term, verbatim from the reference (no reduce)
    costs = costs + D[N - 1:N, 0:1]

    # one vectorized exact divide + one lane-dense unmasked store
    fit_ref[...] = 1.0 / costs


@jax.jit
def _fitness_jit(dm: jax.Array, pop: jax.Array) -> jax.Array:
    N = dm.shape[0]
    P = pop.shape[0]
    L = max(128, ((P + 127) // 128) * 128)      # lane-dense output width

    # TODO(synk): if the population grows large, tile P as a "parallel" grid axis so
    # v7x's second TensorCore is used; at P=8 a single program is optimal.
    fit = pl.pallas_call(
        _fitness_kernel,
        out_shape=jax.ShapeDtypeStruct((1, L), jnp.float32),
        grid=(1,),
        in_specs=[
            pl.BlockSpec((N, N), lambda i: (0, 0)),
            pl.BlockSpec((P, N), lambda i: (0, 0)),
        ],
        out_specs=pl.BlockSpec((1, L), lambda i: (0, 0)),
        compiler_params=pltpu.CompilerParams(dimension_semantics=("arbitrary",)),
    )(dm, pop)
    return fit[0, :P]


def population_fitness_pallas(distance_metric: jax.Array, population: jax.Array) -> jax.Array:
    """Compute 1/cost for every candidate tour with a single batched Pallas kernel."""
    dm = jnp.asarray(distance_metric, dtype=jnp.float32)
    pop = jnp.asarray(population, dtype=jnp.int32)
    return _fitness_jit(dm, pop)


class TSPGeneticAlgoPallas:
    """JAX/Pallas port of TSP_GENETICALGO's evaluable compute."""

    def __init__(self, distance_metric, population_size: int = 10,
                 max_iter: int = 100, mutate_rate: float = 0.2, seed: int = 0):
        dm = jnp.asarray(distance_metric, dtype=jnp.float32)
        assert dm.shape[0] == dm.shape[1], "the distance metric supposed to be identical"
        self.distance_metric = dm
        self.num_node = dm.shape[0]
        self.population_size = population_size
        self.max_iter = max_iter
        self.mutate_rate = mutate_rate
        self.population = self.generate_population(seed)
        # fitness of every candidate, computed in the Pallas kernel (one launch)
        # TODO(synk): when the GA generation loop is added, fold many generations of
        # fitness evaluation into one jit/pallas region to amortize launch overhead.
        self.pop_fitness = population_fitness_pallas(self.distance_metric, self.population)

    def generate_population(self, seed: int) -> jax.Array:
        key = jax.random.PRNGKey(seed)
        keys = jax.random.split(key, self.population_size)
        perms = [jax.random.permutation(k, self.num_node) for k in keys]
        return jnp.stack(perms).astype(jnp.int32)          # (P, N)

    def forward(self, x=None):
        # original forward() is a no-op (`pass`); the module's compute is the fitness
        # evaluation, which we expose here.
        # TODO(synk): the genetic search loop (selection/crossover/mutation) is
        # host-side control flow in the reference and is not a kernel hot path.
        return self.pop_fitness

    __call__ = forward


def _reference_fitness(D: np.ndarray, pop: np.ndarray) -> np.ndarray:
    P, N = pop.shape
    out = np.zeros((P,), dtype=np.float32)
    for c in range(P):
        cost = 0.0
        for i in range(N - 1):                      # consecutive-pair edges
            cost += D[pop[c, i], pop[c, i + 1]]
        cost += D[-1, 0]                            # literal wrap term from reference
        out[c] = 1.0 / cost
    return out


if __name__ == "__main__":
    N = 16          # number of nodes
    P = 8           # population size

    key = jax.random.PRNGKey(0)
    k_dm, _ = jax.random.split(key)
    # deterministic symmetric positive distance matrix, zero diagonal
    raw = jax.random.uniform(k_dm, (N, N), dtype=jnp.float32, minval=0.1, maxval=1.0)
    dm = (raw + raw.T) * 0.5
    dm = dm * (1.0 - jnp.eye(N, dtype=jnp.float32))

    algo = TSPGeneticAlgoPallas(dm, population_size=P, max_iter=100, mutate_rate=0.2, seed=0)
    fitness = jax.block_until_ready(algo.forward(None))

    ref = _reference_fitness(np.asarray(dm), np.asarray(algo.population))
    np.testing.assert_allclose(np.asarray(fitness), ref, rtol=1e-5, atol=1e-6)

    print("KERNEL_OK")
</pallas_src>

<mosaic_0001>
module attributes {stable_mosaic.version = 11 : i64} {
  func.func @_fitness_kernel(%arg0: i32, %arg1: memref<16x16xf32, #tpu.memory_space<vmem>>, %arg2: memref<8x16xi32, #tpu.memory_space<vmem>>, %arg3: memref<1x128xf32, #tpu.memory_space<vmem>>) attributes {dimension_semantics = [#tpu.dimension_semantics<arbitrary>], iteration_bounds = array<i64: 1>, scalar_prefetch = 0 : i64, scratch_operands = 0 : i64, tpu.core_type = #tpu.core_type<tc>, window_params = [{pipeline_mode = #tpu.pipeline_mode<synchronous>, transform_indices = @transform_0, window_bounds = array<i64: 16, 16>}, {pipeline_mode = #tpu.pipeline_mode<synchronous>, transform_indices = @transform_1, window_bounds = array<i64: 8, 16>}, {pipeline_mode = #tpu.pipeline_mode<synchronous>, transform_indices = @transform_2, window_bounds = array<i64: 1, 128>}]} {
    %c0 = arith.constant 0 : index
    %c0_0 = arith.constant 0 : index
    %0 = vector.load %arg1[%c0, %c0_0] : memref<16x16xf32, #tpu.memory_space<vmem>>, vector<16x16xf32>
    %c0_1 = arith.constant 0 : index
    %c0_2 = arith.constant 0 : index
    %1 = vector.load %arg2[%c0_1, %c0_2] : memref<8x16xi32, #tpu.memory_space<vmem>>, vector<8x16xi32>
    %2 = arith.sitofp %1 : vector<8x16xi32> to vector<8x16xf32>
    %3 = tpu.iota {dimensions = array<i32: 1>} : vector<8x128xi32>
    %4 = tpu.iota {dimensions = array<i32: 0>} : vector<8x128xi32>
    %c16_i32 = arith.constant 16 : i32
    %5 = vector.broadcast %c16_i32 : i32 to vector<8x128xi32>
    %6 = arith.muli %4, %5 : vector<8x128xi32>
    %7 = arith.cmpi sge, %3, %6 : vector<8x128xi32>
    %c1_i32 = arith.constant 1 : i32
    %8 = vector.broadcast %c1_i32 : i32 to vector<8x128xi32>
    %9 = arith.addi %4, %8 : vector<8x128xi32>
    %c16_i32_3 = arith.constant 16 : i32
    %10 = vector.broadcast %c16_i32_3 : i32 to vector<8x128xi32>
    %11 = arith.muli %9, %10 : vector<8x128xi32>
    %12 = arith.cmpi slt, %3, %11 : vector<8x128xi32>
    %13 = arith.andi %7, %12 : vector<8x128xi1>
    %14 = arith.extui %13 : vector<8x128xi1> to vector<8x128xi32>
    %15 = arith.sitofp %14 : vector<8x128xi32> to vector<8x128xf32>
    %16 = arith.sitofp %4 : vector<8x128xi32> to vector<8x128xf32>
    %17 = arith.mulf %16, %15 : vector<8x128xf32>
    %cst = arith.constant dense<0.000000e+00> : vector<128xf32>
    %18 = vector.multi_reduction <add>, %17, %cst [0] : vector<8x128xf32> to vector<128xf32>
    %19 = vector.shape_cast %18 : vector<128xf32> to vector<1x128xf32>
    %20 = tpu.iota {dimensions = array<i32: 1>} : vector<1x128xi32>
    %21 = arith.sitofp %20 : vector<1x128xi32> to vector<1x128xf32>
    %cst_4 = arith.constant 1.600000e+01 : f32
    %22 = vector.broadcast %cst_4 : f32 to vector<1x128xf32>
    %23 = arith.mulf %22, %19 : vector<1x128xf32>
    %24 = arith.subf %21, %23 : vector<1x128xf32>
    %25 = tpu.iota {dimensions = array<i32: 0>} : vector<16x128xi32>
    %26 = arith.sitofp %25 : vector<16x128xi32> to vector<16x128xf32>
    %27 = vector.broadcast %24 : vector<1x128xf32> to vector<16x128xf32>
    %28 = arith.cmpf oeq, %26, %27 : vector<16x128xf32>
    %29 = arith.extui %28 : vector<16x128xi1> to vector<16x128xi32>
    %30 = arith.sitofp %29 : vector<16x128xi32> to vector<16x128xf32>
    %cst_5 = arith.constant 1.000000e+00 : f32
    %31 = vector.broadcast %cst_5 : f32 to vector<1x128xf32>
    %32 = arith.addf %24, %31 : vector<1x128xf32>
    %33 = vector.broadcast %32 : vector<1x128xf32> to vector<16x128xf32>
    %34 = arith.cmpf oeq, %26, %33 : vector<16x128xf32>
    %35 = arith.extui %34 : vector<16x128xi1> to vector<16x128xi32>
    %36 = arith.sitofp %35 : vector<16x128xi32> to vector<16x128xf32>
    %cst_6 = arith.constant dense<0.000000e+00> : vector<8x128xf32>
    %37 = tpu.matmul %2, %30, %cst_6 {dimension_numbers = #tpu.dot_dimension_numbers<[1], [0], [0], [1], [0, 0, 1, 1], [], []>} : vector<8x16xf32>, vector<16x128xf32>, vector<8x128xf32> -> vector<8x128xf32>
    %cst_7 = arith.constant dense<0.000000e+00> : vector<8x128xf32>
    %38 = tpu.matmul %2, %36, %cst_7 {dimension_numbers = #tpu.dot_dimension_numbers<[1], [0], [0], [1], [0, 0, 1, 1], [], []>} : vector<8x16xf32>, vector<16x128xf32>, vector<8x128xf32> -> vector<8x128xf32>
    %39 = arith.mulf %15, %37 : vector<8x128xf32>
    %cst_8 = arith.constant dense<0.000000e+00> : vector<128xf32>
    %40 = vector.multi_reduction <add>, %39, %cst_8 [0] : vector<8x128xf32> to vector<128xf32>
    %41 = vector.shape_cast %40 : vector<128xf32> to vector<1x128xf32>
    %42 = arith.mulf %15, %38 : vector<8x128xf32>
    %cst_9 = arith.constant dense<0.000000e+00> : vector<128xf32>
    %43 = vector.multi_reduction <add>, %42, %cst_9 [0] : vector<8x128xf32> to vector<128xf32>
    %44 = vector.shape_cast %43 : vector<128xf32> to vector<1x128xf32>
    %45 = vector.broadcast %41 : vector<1x128xf32> to vector<16x128xf32>
    %46 = arith.cmpf oeq, %26, %45 : vector<16x128xf32>
    %47 = arith.extui %46 : vector<16x128xi1> to vector<16x128xi32>
    %48 = arith.sitofp %47 : vector<16x128xi32> to vector<16x128xf32>
    %49 = vector.broadcast %44 : vector<1x128xf32> to vector<16x128xf32>
    %50 = arith.cmpf oeq, %26, %49 : vector<16x128xf32>
    %51 = arith.extui %50 : vector<16x128xi1> to vector<16x128xi32>
    %52 = arith.sitofp %51 : vector<16x128xi32> to vector<16x128xf32>
    %cst_10 = arith.constant dense<0.000000e+00> : vector<16x128xf32>
    %53 = tpu.matmul %0, %52, %cst_10 {dimension_numbers = #tpu.dot_dimension_numbers<[1], [0], [0], [1], [0, 0, 1, 1], [], []>} : vector<16x16xf32>, vector<16x128xf32>, vector<16x128xf32> -> vector<16x128xf32>
    %cst_11 = arith.constant 1.500000e+01 : f32
    %54 = vector.broadcast %cst_11 : f32 to vector<1x128xf32>
    %55 = arith.cmpf olt, %24, %54 : vector<1x128xf32>
    %56 = arith.extui %55 : vector<1x128xi1> to vector<1x128xi32>
    %57 = arith.sitofp %56 : vector<1x128xi32> to vector<1x128xf32>
    %58 = arith.mulf %48, %53 : vector<16x128xf32>
    %cst_12 = arith.constant dense<0.000000e+00> : vector<128xf32>
    %59 = vector.multi_reduction <add>, %58, %cst_12 [0] : vector<16x128xf32> to vector<128xf32>
    %60 = vector.shape_cast %59 : vector<128xf32> to vector<1x128xf32>
    %61 = arith.mulf %60, %57 : vector<1x128xf32>
    %62 = tpu.iota {dimensions = array<i32: 0>} : vector<128x128xi32>
    %63 = tpu.iota {dimensions = array<i32: 1>} : vector<128x128xi32>
    %c16_i32_13 = arith.constant 16 : i32
    %64 = vector.broadcast %c16_i32_13 : i32 to vector<128x128xi32>
    %65 = arith.muli %63, %64 : vector<128x128xi32>
    %66 = arith.cmpi sge, %62, %65 : vector<128x128xi32>
    %c1_i32_14 = arith.constant 1 : i32
    %67 = vector.broadcast %c1_i32_14 : i32 to vector<128x128xi32>
    %68 = arith.addi %63, %67 : vector<128x128xi32>
    %c16_i32_15 = arith.constant 16 : i32
    %69 = vector.broadcast %c16_i32_15 : i32 to vector<128x128xi32>
    %70 = arith.muli %68, %69 : vector<128x128xi32>
    %71 = arith.cmpi slt, %62, %70 : vector<128x128xi32>
    %72 = arith.andi %66, %71 : vector<128x128xi1>
    %73 = arith.extui %72 : vector<128x128xi1> to vector<128x128xi32>
    %74 = arith.sitofp %73 : vector<128x128xi32> to vector<128x128xf32>
    %cst_16 = arith.constant dense<0.000000e+00> : vector<1x128xf32>
    %75 = tpu.matmul %61, %74, %cst_16 {dimension_numbers = #tpu.dot_dimension_numbers<[1], [0], [0], [1], [0, 0, 1, 1], [], []>} : vector<1x128xf32>, vector<128x128xf32>, vector<1x128xf32> -> vector<1x128xf32>
    %76 = vector.extract_strided_slice %0 {offsets = [15, 0], sizes = [1, 1], strides = [1, 1]} : vector<16x16xf32> to vector<1x1xf32>
    %77 = vector.broadcast %76 : vector<1x1xf32> to vector<1x128xf32>
    %78 = arith.addf %75, %77 : vector<1x128xf32>
    %cst_17 = arith.constant 1.000000e+00 : f32
    %79 = vector.broadcast %cst_17 : f32 to vector<1x128xf32>
    %80 = arith.divf %79, %78 : vector<1x128xf32>
    %c0_18 = arith.constant 0 : index
    %c0_19 = arith.constant 0 : index
    %81 = vector.load %arg3[%c0_18, %c0_19] : memref<1x128xf32, #tpu.memory_space<vmem>>, vector<1x128xf32>
    tpu.vector_store %arg3[%c0_18, %c0_19], %80 {strides = array<i32>} : memref<1x128xf32, #tpu.memory_space<vmem>>, vector<1x128xf32>,
    return
  }
  func.func @transform_0(%arg0: i32) -> (i32, i32) {
    %c0_i32 = arith.constant 0 : i32
    %c0_i32_0 = arith.constant 0 : i32
    %c0_i32_1 = arith.constant 0 : i32
    return %c0_i32, %c0_i32_0 : i32, i32
  }
  func.func @transform_1(%arg0: i32) -> (i32, i32) {
    %c0_i32 = arith.constant 0 : i32
    %c0_i32_0 = arith.constant 0 : i32
    %c0_i32_1 = arith.constant 0 : i32
    return %c0_i32, %c0_i32_0 : i32, i32
  }
  func.func @transform_2(%arg0: i32) -> (i32, i32) {
    %c0_i32 = arith.constant 0 : i32
    %c0_i32_0 = arith.constant 0 : i32
    %c0_i32_1 = arith.constant 0 : i32
    return %c0_i32, %c0_i32_0 : i32, i32
  }
}

</mosaic_0001>

<llo_original>
// kernel: _fitness_jit.1
$region0: #{_fitness_jit.1}
  #allocation0 [shape = 'u32[]', space=smem, size = 0x4, offset = 0x4, fixed_abs, tag = 'smem constant byte address 0x4 - core index']
  #allocation1 [shape = 'u32[144,128]{1,0:T(1,128)}', space=vmem, size = 0x12000, scoped, tag = 'internal scratch']
  %s0 = inlined_call_operand.hbm [shape: f32[16,16], index: 0, kind: input, shape index: {}]
  %s1 = inlined_call_operand.hbm [shape: s32[8,16], index: 1, kind: input, shape index: {}]
  %s2 = inlined_call_operand.vmem [shape: f32[1,128], index: 2, kind: output, shape index: {}]
  %s3 = sld [smem:[#allocation0]]
  $region26: #{_fitness_jit.1} parent=0
    _
  %s5 = ssub.s32 1, %s3
  %s6 = scalar_select 0, %s5, %s3
  $region1: #{_fitness_jit.1} parent=0
    #allocation2 [shape = 'u8[8192]{0}', space=vmem, size = 0x2000, scoped, tag = 'input window, operand 0, single buffered']
    #allocation3 [shape = 's32[1]{0}', space=sflag, size = 0x4, scoped, tag = 'scoped memory for _fitness_jit.1']
    #allocation4 [shape = 'u8[4096]{0}', space=vmem, size = 0x1000, scoped, tag = 'input window, operand 1, single buffered']
    #allocation5 [shape = 's32[1]{0}', space=sflag, size = 0x4, scoped, tag = 'scoped memory for _fitness_jit.1']
    %7 = vsyncpa [#allocation3], 0
    %8 = vsyncpa [#allocation5], 0
    // Predicated region
    $region2: #{_fitness_jit.1} parent=1 // pred_check
      _
    $region3: #{_fitness_jit.1} parent=1 // pred_check_branch
      %10 = sbr.rel (0) target = $region5
    $region4: #{_fitness_jit.1} parent=1 // pred_region
      %s12 = ssub.s32 256, 256
      %13 = vsyncadd [#allocation3], %s12
      %s14 = sshll.u32 [#allocation2], 4
      %s15 = int_to_ptr.vmem [resolvable:$true] %s14
      %20 = dma.hbm_to_vmem [thread:$0]  %s0, 256, %s15, [#allocation3], 128, 128, 8
    $region5: #{_fitness_jit.1} parent=1 // pred_fallthru
      _
    // Predicated region
    $region6: #{_fitness_jit.1} parent=1 // pred_check
      _
    $region7: #{_fitness_jit.1} parent=1 // pred_check_branch
      %22 = sbr.rel (0) target = $region9
    $region8: #{_fitness_jit.1} parent=1 // pred_region
      %s24 = ssub.s32 128, 128
      %25 = vsyncadd [#allocation5], %s24
      %s27 = sshll.u32 [#allocation4], 4
      %s28 = int_to_ptr.vmem [resolvable:$true] %s27
      %30 = dma.hbm_to_vmem [thread:$0]  %s1, 128, %s28, [#allocation5]
    $region9: #{_fitness_jit.1} parent=1 // pred_fallthru
      _
    // Predicated region
    $region10: #{_fitness_jit.1} parent=1 // pred_check
      _
    $region11: #{_fitness_jit.1} parent=1 // pred_check_branch
      %32 = sbr.rel (0) target = $region13
    $region12: #{_fitness_jit.1} parent=1 // pred_region
      %33 = dma.done [#allocation3], 256
    $region13: #{_fitness_jit.1} parent=1 // pred_fallthru
      _
    // Predicated region
    $region14: #{_fitness_jit.1} parent=1 // pred_check
      _
    $region15: #{_fitness_jit.1} parent=1 // pred_check_branch
      %35 = sbr.rel (0) target = $region17
    $region16: #{_fitness_jit.1} parent=1 // pred_region
      %36 = dma.done [#allocation5], 128
    $region17: #{_fitness_jit.1} parent=1 // pred_fallthru
      _
    %v37 = vld [vmem:[#allocation2] sm:$0xff]
    %v38 = vld [vmem:[#allocation2 + $0x8] sm:$0xff]
    %v39 = vld [vmem:[#allocation4] sm:$0xff]
    %v40 = vcvt.s32.f32 %v39
    %v41 = vlaneseq
    %v42 = vand.u32 %v41, 127
    %v43 = vlaneseq
    %v44 = vshrl.u32 %v43, 7
    %v45 = vmul.u32 %v44, 16
    %vm46 = vcmp.ge.s32.totalorder %v42, %v45
    %v47 = vadd.s32 %v44, 1
    %v48 = vmul.u32 %v47, 16
    %vm49 = vcmp.lt.s32.totalorder %v42, %v48
    %vm50 = vmand %vm46, %vm49
    %v51 = vsel %vm50, 1, 0
    %v52 = vcvt.s32.f32 %v51
    %v53 = vcvt.s32.f32 %v44
    %v54 = vmul.f32 %v53, %v52
    %v55 = vrot.slane %v54, 4
    %v56 = vadd.f32 %v54, %v55
    %v57 = vrot.slane %v56, 2
    %v58 = vadd.f32 %v56, %v57
    %v59 = vrot.slane %v58, 1
    %v60 = vadd.f32 %v58, %v59
    %v61 = vcvt.s32.f32 %v42
    %v62 = vmul.f32 %v60, 16.0
    %v63 = vsub.f32 %v61, %v62
    %v64 = vadd.s32 %v44, 8
    %v65 = vcvt.s32.f32 %v64
    %vm66 = vcmp.eq.f32.partialorder %v53, %v63
    %vm67 = vcmp.eq.f32.partialorder %v65, %v63
    %v68 = vsel %vm66, 1, 0
    %v69 = vsel %vm67, 1, 0
    %v70 = vcvt.s32.f32 %v68
    %v71 = vcvt.s32.f32 %v69
    %v72 = vadd.f32 %v63, 1.0
    %vm73 = vcmp.eq.f32.partialorder %v53, %v72
    %vm74 = vcmp.eq.f32.partialorder %v65, %v72
    %v75 = vsel %vm73, 1, 0
    %v76 = vsel %vm74, 1, 0
    %v77 = vcvt.s32.f32 %v75
    %v78 = vcvt.s32.f32 %v76
    %vm79 = vcmask 130048
    %v81 = vsel %vm79, %v40, 0
    %83 = vmatprep.subr.mxu0 0.0
    %84 = vmatpush1.msra.mxu0 %v70
    %85 = vmatprep.subr.mxu0 0.0
    %86 = vmatpush1.msra.mxu0 %v71
    %87 = vmatprep.subr.mxu0 0.0
    %88 = vmatpush1.msra.mxu0 0.0
    %89 = vmatprep.subr.mxu0 0.0
    %90 = vmatpush1.msra.mxu0 0.0
    %91 = vmatprep.subr.mxu0 0.0
    %92 = vmatpush1.msra.mxu0 0.0
    %93 = vmatprep.subr.mxu0 0.0
    %94 = vmatpush1.msra.mxu0 0.0
    %95 = vmatprep.subr.mxu0 0.0
    %96 = vmatpush1.msra.mxu0 0.0
    %97 = vmatprep.subr.mxu0 0.0
    %98 = vmatpush1.msra.mxu0 0.0
    %99 = vmatprep.subr.mxu0 0.0
    %100 = vmatpush1.msra.mxu0 0.0
    %101 = vmatprep.subr.mxu0 0.0
    %102 = vmatpush1.msra.mxu0 0.0
    %103 = vmatprep.subr.mxu0 0.0
    %104 = vmatpush1.msra.mxu0 0.0
    %105 = vmatprep.subr.mxu0 0.0
    %106 = vmatpush1.msra.mxu0 0.0
    %107 = vmatprep.subr.mxu0 0.0
    %108 = vmatpush1.msra.mxu0 0.0
    %109 = vmatprep.subr.mxu0 0.0
    %110 = vmatpush1.msra.mxu0 0.0
    %111 = vmatprep.subr.mxu0 0.0
    %112 = vmatpush1.msra.mxu0 0.0
    %113 = vmatprep.subr.mxu0 0.0
    %114 = vmatpush1.msra.mxu0 0.0
    %115 = vmatprep.subr.mxu0 0.0
    %116 = vmatpush1.msra.mxu0 0.0
    %117 = vmatprep.subr.mxu0 0.0
    %118 = vmatpush1.msra.mxu0 0.0
    %119 = vmatprep.subr.mxu0 0.0
    %120 = vmatpush1.msra.mxu0 0.0
    %121 = vmatprep.subr.mxu0 0.0
    %122 = vmatpush1.msra.mxu0 0.0
    %123 = vmatprep.subr.mxu0 0.0
    %124 = vmatpush1.msra.mxu0 0.0
    %125 = vmatprep.subr.mxu0 0.0
    %126 = vmatpush1.msra.mxu0 0.0
    %127 = vmatprep.subr.mxu0 0.0
    %128 = vmatpush1.msra.mxu0 0.0
    %129 = vmatprep.subr.mxu0 0.0
    %130 = vmatpush1.msra.mxu0 0.0
    %131 = vmatprep.subr.mxu0 0.0
    %132 = vmatpush1.msra.mxu0 0.0
    %133 = vmatprep.subr.mxu0 0.0
    %134 = vmatpush1.msra.mxu0 0.0
    %135 = vmatprep.subr.mxu0 0.0
    %136 = vmatpush1.msra.mxu0 0.0
    %137 = vmatprep.subr.mxu0 0.0
    %138 = vmatpush1.msra.mxu0 0.0
    %139 = vmatprep.subr.mxu0 0.0
    %140 = vmatpush1.msra.mxu0 0.0
    %141 = vmatprep.subr.mxu0 0.0
    %142 = vmatpush1.msra.mxu0 0.0
    %143 = vmatprep.subr.mxu0 0.0
    %144 = vmatpush1.msra.mxu0 0.0
    %145 = vmatprep.subr.mxu0 0.0
    %146 = vmatpush1.msra.mxu0 0.0
    %147 = vmatprep.mubr.f32.mxu0 0.0
    %148 = vmatmul.mubr.f32.gmra.mrb[0].mxu0 %v81
    %v149 = vpop.f32.mrb[0].mxu0
    %v150 = vadd.f32 0.0, %v149
    %v151 = vpop.f32.mrb[0].mxu0
    %152 = vdwg.mxu0
    %153 = vmatprep.subr.mxu0 0.0
    %154 = vmatpush1.msra.mxu0 %v77
    %155 = vmatprep.subr.mxu0 0.0
    %156 = vmatpush1.msra.mxu0 %v78
    %157 = vmatprep.subr.mxu0 0.0
    %158 = vmatpush1.msra.mxu0 0.0
    %159 = vmatprep.subr.mxu0 0.0
    %160 = vmatpush1.msra.mxu0 0.0
    %161 = vmatprep.subr.mxu0 0.0
    %162 = vmatpush1.msra.mxu0 0.0
    %163 = vmatprep.subr.mxu0 0.0
    %164 = vmatpush1.msra.mxu0 0.0
    %165 = vmatprep.subr.mxu0 0.0
    %166 = vmatpush1.msra.mxu0 0.0
    %167 = vmatprep.subr.mxu0 0.0
    %168 = vmatpush1.msra.mxu0 0.0
    %169 = vmatprep.subr.mxu0 0.0
    %170 = vmatpush1.msra.mxu0 0.0
    %171 = vmatprep.subr.mxu0 0.0
    %172 = vmatpush1.msra.mxu0 0.0
    %173 = vmatprep.subr.mxu0 0.0
    %174 = vmatpush1.msra.mxu0 0.0
    %175 = vmatprep.subr.mxu0 0.0
    %176 = vmatpush1.msra.mxu0 0.0
    %177 = vmatprep.subr.mxu0 0.0
    %178 = vmatpush1.msra.mxu0 0.0
    %179 = vmatprep.subr.mxu0 0.0
    %180 = vmatpush1.msra.mxu0 0.0
    %181 = vmatprep.subr.mxu0 0.0
    %182 = vmatpush1.msra.mxu0 0.0
    %183 = vmatprep.subr.mxu0 0.0
    %184 = vmatpush1.msra.mxu0 0.0
    %185 = vmatprep.subr.mxu0 0.0
    %186 = vmatpush1.msra.mxu0 0.0
    %187 = vmatprep.subr.mxu0 0.0
    %188 = vmatpush1.msra.mxu0 0.0
    %189 = vmatprep.subr.mxu0 0.0
    %190 = vmatpush1.msra.mxu0 0.0
    %191 = vmatprep.subr.mxu0 0.0
    %192 = vmatpush1.msra.mxu0 0.0
    %193 = vmatprep.subr.mxu0 0.0
    %194 = vmatpush1.msra.mxu0 0.0
    %195 = vmatprep.subr.mxu0 0.0
    %196 = vmatpush1.msra.mxu0 0.0
    %197 = vmatprep.subr.mxu0 0.0
    %198 = vmatpush1.msra.mxu0 0.0
    %199 = vmatprep.subr.mxu0 0.0
    %200 = vmatpush1.msra.mxu0 0.0
    %201 = vmatprep.subr.mxu0 0.0
    %202 = vmatpush1.msra.mxu0 0.0
    %203 = vmatprep.subr.mxu0 0.0
    %204 = vmatpush1.msra.mxu0 0.0
    %205 = vmatprep.subr.mxu0 0.0
    %206 = vmatpush1.msra.mxu0 0.0
    %207 = vmatprep.subr.mxu0 0.0
    %208 = vmatpush1.msra.mxu0 0.0
    %209 = vmatprep.subr.mxu0 0.0
    %210 = vmatpush1.msra.mxu0 0.0
    %211 = vmatprep.subr.mxu0 0.0
    %212 = vmatpush1.msra.mxu0 0.0
    %213 = vmatprep.subr.mxu0 0.0
    %214 = vmatpush1.msra.mxu0 0.0
    %215 = vmatprep.subr.mxu0 0.0
    %216 = vmatpush1.msra.mxu0 0.0
    %217 = vmatprep.mubr.f32.mxu0 0.0
    %218 = vmatmul.mubr.f32.gmra.mrb[0].mxu0 %v81
    %v219 = vpop.f32.mrb[0].mxu0
    %v220 = vadd.f32 0.0, %v219
    %v221 = vpop.f32.mrb[0].mxu0
    %222 = vdwg.mxu0
    %v223 = vmul.f32 %v52, %v150
    %v224 = vrot.slane %v223, 4
    %v225 = vadd.f32 %v223, %v224
    %v226 = vrot.slane %v225, 2
    %v227 = vadd.f32 %v225, %v226
    %v228 = vrot.slane %v227, 1
    %v229 = vadd.f32 %v227, %v228
    %v230 = vmul.f32 %v52, %v220
    %v231 = vrot.slane %v230, 4
    %v232 = vadd.f32 %v230, %v231
    %v233 = vrot.slane %v232, 2
    %v234 = vadd.f32 %v232, %v233
    %v235 = vrot.slane %v234, 1
    %v236 = vadd.f32 %v234, %v235
    %vm237 = vcmp.eq.f32.partialorder %v53, %v229
    %vm238 = vcmp.eq.f32.partialorder %v65, %v229
    %v239 = vsel %vm237, 1, 0
    %v240 = vsel %vm238, 1, 0
    %v241 = vcvt.s32.f32 %v239
    %v242 = vcvt.s32.f32 %v240
    %vm243 = vcmp.eq.f32.partialorder %v53, %v236
    %vm244 = vcmp.eq.f32.partialorder %v65, %v236
    %v245 = vsel %vm243, 1, 0
    %v246 = vsel %vm244, 1, 0
    %v247 = vcvt.s32.f32 %v245
    %v248 = vcvt.s32.f32 %v246
    %v250 = vsel %vm79, %v37, 0
    %v253 = vsel %vm79, %v38, 0
    %255 = vmatprep.subr.mxu0 0.0
    %256 = vmatpush1.msra.mxu0 %v247
    %257 = vmatprep.subr.mxu0 0.0
    %258 = vmatpush1.msra.mxu0 %v248
    %259 = vmatprep.subr.mxu0 0.0
    %260 = vmatpush1.msra.mxu0 0.0
    %261 = vmatprep.subr.mxu0 0.0
    %262 = vmatpush1.msra.mxu0 0.0
    %263 = vmatprep.subr.mxu0 0.0
    %264 = vmatpush1.msra.mxu0 0.0
    %265 = vmatprep.subr.mxu0 0.0
    %266 = vmatpush1.msra.mxu0 0.0
    %267 = vmatprep.subr.mxu0 0.0
    %268 = vmatpush1.msra.mxu0 0.0
    %269 = vmatprep.subr.mxu0 0.0
    %270 = vmatpush1.msra.mxu0 0.0
    %271 = vmatprep.subr.mxu0 0.0
    %272 = vmatpush1.msra.mxu0 0.0
    %273 = vmatprep.subr.mxu0 0.0
    %274 = vmatpush1.msra.mxu0 0.0
    %275 = vmatprep.subr.mxu0 0.0
    %276 = vmatpush1.msra.mxu0 0.0
    %277 = vmatprep.subr.mxu0 0.0
    %278 = vmatpush1.msra.mxu0 0.0
    %279 = vmatprep.subr.mxu0 0.0
    %280 = vmatpush1.msra.mxu0 0.0
    %281 = vmatprep.subr.mxu0 0.0
    %282 = vmatpush1.msra.mxu0 0.0
    %283 = vmatprep.subr.mxu0 0.0
    %284 = vmatpush1.msra.mxu0 0.0
    %285 = vmatprep.subr.mxu0 0.0
    %286 = vmatpush1.msra.mxu0 0.0
    %287 = vmatprep.subr.mxu0 0.0
    %288 = vmatpush1.msra.mxu0 0.0
    %289 = vmatprep.subr.mxu0 0.0
    %290 = vmatpush1.msra.mxu0 0.0
    %291 = vmatprep.subr.mxu0 0.0
    %292 = vmatpush1.msra.mxu0 0.0
    %293 = vmatprep.subr.mxu0 0.0
    %294 = vmatpush1.msra.mxu0 0.0
    %295 = vmatprep.subr.mxu0 0.0
    %296 = vmatpush1.msra.mxu0 0.0
    %297 = vmatprep.subr.mxu0 0.0
    %298 = vmatpush1.msra.mxu0 0.0
    %299 = vmatprep.subr.mxu0 0.0
    %300 = vmatpush1.msra.mxu0 0.0
    %301 = vmatprep.subr.mxu0 0.0
    %302 = vmatpush1.msra.mxu0 0.0
    %303 = vmatprep.subr.mxu0 0.0
    %304 = vmatpush1.msra.mxu0 0.0
    %305 = vmatprep.subr.mxu0 0.0
    %306 = vmatpush1.msra.mxu0 0.0
    %307 = vmatprep.subr.mxu0 0.0
    %308 = vmatpush1.msra.mxu0 0.0
    %309 = vmatprep.subr.mxu0 0.0
    %310 = vmatpush1.msra.mxu0 0.0
    %311 = vmatprep.subr.mxu0 0.0
    %312 = vmatpush1.msra.mxu0 0.0
    %313 = vmatprep.subr.mxu0 0.0
    %314 = vmatpush1.msra.mxu0 0.0
    %315 = vmatprep.subr.mxu0 0.0
    %316 = vmatpush1.msra.mxu0 0.0
    %317 = vmatprep.subr.mxu0 0.0
    %318 = vmatpush1.msra.mxu0 0.0
    %319 = vmatprep.mubr.f32.mxu0 0.0
    %320 = vmatmul.mubr.f32.gmra.mrb[0].mxu0 %v250
    %v321 = vpop.f32.mrb[0].mxu0
    %v322 = vadd.f32 0.0, %v321
    %v323 = vpop.f32.mrb[0].mxu0
    %324 = vmatprep.mubr.f32.mxu0 0.0
    %325 = vmatmul.mubr.f32.gmra.mrb[0].mxu0 %v253
    %v326 = vpop.f32.mrb[0].mxu0
    %v327 = vadd.f32 0.0, %v326
    %v328 = vpop.f32.mrb[0].mxu0
    %329 = vdwg.mxu0
    %vm330 = vcmp.lt.f32.partialorder %v63, 15.0
    %v331 = vsel %vm330, 1, 0
    %v332 = vcvt.s32.f32 %v331
    %v333 = vmul.f32 %v241, %v322
    %v334 = vmul.f32 %v242, %v327
    %v335 = vadd.f32 %v333, %v334
    %v336 = vrot.slane %v335, 4
    %v337 = vadd.f32 %v335, %v336
    %v338 = vrot.slane %v337, 2
    %v339 = vadd.f32 %v337, %v338
    %v340 = vrot.slane %v339, 1
    %v341 = vadd.f32 %v339, %v340
    %v342 = vmul.f32 %v341, %v332
    %v343 = vadd.s32 %v44, 16
    %v344 = vadd.s32 %v44, 24
    %v345 = vadd.s32 %v44, 32
    %v346 = vadd.s32 %v44, 40
    %v347 = vadd.s32 %v44, 48
    %v348 = vadd.s32 %v44, 56
    %v349 = vadd.s32 %v44, 64
    %v350 = vadd.s32 %v44, 72
    %v351 = vadd.s32 %v44, 80
    %v352 = vadd.s32 %v44, 88
    %v353 = vadd.s32 %v44, 96
    %v354 = vadd.s32 %v44, 104
    %v355 = vadd.s32 %v44, 112
    %v356 = vadd.s32 %v44, 120
    %v357 = vmul.u32 %v42, 16
    %vm358 = vcmp.ge.s32.totalorder %v44, %v357
    %vm359 = vcmp.ge.s32.totalorder %v64, %v357
    %vm360 = vcmp.ge.s32.totalorder %v343, %v357
    %vm361 = vcmp.ge.s32.totalorder %v344, %v357
    %vm362 = vcmp.ge.s32.totalorder %v345, %v357
    %vm363 = vcmp.ge.s32.totalorder %v346, %v357
    %vm364 = vcmp.ge.s32.totalorder %v347, %v357
    %vm365 = vcmp.ge.s32.totalorder %v348, %v357
    %vm366 = vcmp.ge.s32.totalorder %v349, %v357
    %vm367 = vcmp.ge.s32.totalorder %v350, %v357
    %vm368 = vcmp.ge.s32.totalorder %v351, %v357
    %vm369 = vcmp.ge.s32.totalorder %v352, %v357
    %vm370 = vcmp.ge.s32.totalorder %v353, %v357
    %vm371 = vcmp.ge.s32.totalorder %v354, %v357
    %vm372 = vcmp.ge.s32.totalorder %v355, %v357
    %vm373 = vcmp.ge.s32.totalorder %v356, %v357
    %v374 = vadd.s32 %v42, 1
    %v375 = vmul.u32 %v374, 16
    %vm376 = vcmp.lt.s32.totalorder %v44, %v375
    %vm377 = vcmp.lt.s32.totalorder %v64, %v375
    %vm378 = vcmp.lt.s32.totalorder %v343, %v375
    %vm379 = vcmp.lt.s32.totalorder %v344, %v375
    %vm380 = vcmp.lt.s32.totalorder %v345, %v375
    %vm381 = vcmp.lt.s32.totalorder %v346, %v375
    %vm382 = vcmp.lt.s32.totalorder %v347, %v375
    %vm383 = vcmp.lt.s32.totalorder %v348, %v375
    %vm384 = vcmp.lt.s32.totalorder %v349, %v375
    %vm385 = vcmp.lt.s32.totalorder %v350, %v375
    %vm386 = vcmp.lt.s32.totalorder %v351, %v375
    %vm387 = vcmp.lt.s32.totalorder %v352, %v375
    %vm388 = vcmp.lt.s32.totalorder %v353, %v375
    %vm389 = vcmp.lt.s32.totalorder %v354, %v375
    %vm390 = vcmp.lt.s32.totalorder %v355, %v375
    %vm391 = vcmp.lt.s32.totalorder %v356, %v375
    %vm392 = vmand %vm358, %vm376
    %vm393 = vmand %vm359, %vm377
    %vm394 = vmand %vm360, %vm378
    %vm395 = vmand %vm361, %vm379
    %vm396 = vmand %vm362, %vm380
    %vm397 = vmand %vm363, %vm381
    %vm398 = vmand %vm364, %vm382
    %vm399 = vmand %vm365, %vm383
    %vm400 = vmand %vm366, %vm384
    %vm401 = vmand %vm367, %vm385
    %vm402 = vmand %vm368, %vm386
    %vm403 = vmand %vm369, %vm387
    %vm404 = vmand %vm370, %vm388
    %vm405 = vmand %vm371, %vm389
    %vm406 = vmand %vm372, %vm390
    %vm407 = vmand %vm373, %vm391
    %v408 = vsel %vm392, 1, 0
    %v409 = vsel %vm393, 1, 0
    %v410 = vsel %vm394, 1, 0
    %v411 = vsel %vm395, 1, 0
    %v412 = vsel %vm396, 1, 0
    %v413 = vsel %vm397, 1, 0
    %v414 = vsel %vm398, 1, 0
    %v415 = vsel %vm399, 1, 0
    %v416 = vsel %vm400, 1, 0
    %v417 = vsel %vm401, 1, 0
    %v418 = vsel %vm402, 1, 0
    %v419 = vsel %vm403, 1, 0
    %v420 = vsel %vm404, 1, 0
    %v421 = vsel %vm405, 1, 0
    %v422 = vsel %vm406, 1, 0
    %v423 = vsel %vm407, 1, 0
    %v424 = vcvt.s32.f32 %v408
    %v425 = vcvt.s32.f32 %v409
    %v426 = vcvt.s32.f32 %v410
    %v427 = vcvt.s32.f32 %v411
    %v428 = vcvt.s32.f32 %v412
    %v429 = vcvt.s32.f32 %v413
    %v430 = vcvt.s32.f32 %v414
    %v431 = vcvt.s32.f32 %v415
    %v432 = vcvt.s32.f32 %v416
    %v433 = vcvt.s32.f32 %v417
    %v434 = vcvt.s32.f32 %v418
    %v435 = vcvt.s32.f32 %v419
    %v436 = vcvt.s32.f32 %v420
    %v437 = vcvt.s32.f32 %v421
    %v438 = vcvt.s32.f32 %v422
    %v439 = vcvt.s32.f32 %v423
    %440 = vset.pattern.permute.xlu0 0
    %441 = vperm.xlu0 %440, %v38
    %v442 = vpop.permute.xlu0 %441
    %v443 = vrot.slane %v442, 7
    %445 = vmatprep.subr.mxu0 0.0
    %446 = vmatpush1.msra.mxu0 %v424
    %447 = vmatprep.subr.mxu0 0.0
    %448 = vmatpush1.msra.mxu0 %v425
    %449 = vmatprep.subr.mxu0 0.0
    %450 = vmatpush1.msra.mxu0 %v426
    %451 = vmatprep.subr.mxu0 0.0
    %452 = vmatpush1.msra.mxu0 %v427
    %453 = vmatprep.subr.mxu0 0.0
    %454 = vmatpush1.msra.mxu0 %v428
    %455 = vmatprep.subr.mxu0 0.0
    %456 = vmatpush1.msra.mxu0 %v429
    %457 = vmatprep.subr.mxu0 0.0
    %458 = vmatpush1.msra.mxu0 %v430
    %459 = vmatprep.subr.mxu0 0.0
    %460 = vmatpush1.msra.mxu0 %v431
    %461 = vmatprep.subr.mxu0 0.0
    %462 = vmatpush1.msra.mxu0 %v432
    %463 = vmatprep.subr.mxu0 0.0
    %464 = vmatpush1.msra.mxu0 %v433
    %465 = vmatprep.subr.mxu0 0.0
    %466 = vmatpush1.msra.mxu0 %v434
    %467 = vmatprep.subr.mxu0 0.0
    %468 = vmatpush1.msra.mxu0 %v435
    %469 = vmatprep.subr.mxu0 0.0
    %470 = vmatpush1.msra.mxu0 %v436
    %471 = vmatprep.subr.mxu0 0.0
    %472 = vmatpush1.msra.mxu0 %v437
    %473 = vmatprep.subr.mxu0 0.0
    %474 = vmatpush1.msra.mxu0 %v438
    %475 = vmatprep.subr.mxu0 0.0
    %476 = vmatpush1.msra.mxu0 %v439
    %477 = vmatprep.subr.mxu0 0.0
    %478 = vmatpush1.msra.mxu0 0.0
    %479 = vmatprep.subr.mxu0 0.0
    %480 = vmatpush1.msra.mxu0 0.0
    %481 = vmatprep.subr.mxu0 0.0
    %482 = vmatpush1.msra.mxu0 0.0
    %483 = vmatprep.subr.mxu0 0.0
    %484 = vmatpush1.msra.mxu0 0.0
    %485 = vmatprep.subr.mxu0 0.0
    %486 = vmatpush1.msra.mxu0 0.0
    %487 = vmatprep.subr.mxu0 0.0
    %488 = vmatpush1.msra.mxu0 0.0
    %489 = vmatprep.subr.mxu0 0.0
    %490 = vmatpush1.msra.mxu0 0.0
    %491 = vmatprep.subr.mxu0 0.0
    %492 = vmatpush1.msra.mxu0 0.0
    %493 = vmatprep.subr.mxu0 0.0
    %494 = vmatpush1.msra.mxu0 0.0
    %495 = vmatprep.subr.mxu0 0.0
    %496 = vmatpush1.msra.mxu0 0.0
    %497 = vmatprep.subr.mxu0 0.0
    %498 = vmatpush1.msra.mxu0 0.0
    %499 = vmatprep.subr.mxu0 0.0
    %500 = vmatpush1.msra.mxu0 0.0
    %501 = vmatprep.subr.mxu0 0.0
    %502 = vmatpush1.msra.mxu0 0.0
    %503 = vmatprep.subr.mxu0 0.0
    %504 = vmatpush1.msra.mxu0 0.0
    %505 = vmatprep.subr.mxu0 0.0
    %506 = vmatpush1.msra.mxu0 0.0
    %507 = vmatprep.subr.mxu0 0.0
    %508 = vmatpush1.msra.mxu0 0.0
    %509 = vmatprep.mubr.f32.mxu0 0.0
    %510 = vmatmul.mubr.f32.gmra.mrb[0].mxu0 %v342
    %v511 = vpop.f32.mrb[0].mxu0
    %v512 = vadd.f32 %v443, %v511
    %v513 = vpop.f32.mrb[0].mxu0
    %514 = vdwg.mxu0
    %v515 = vrcp.pop %v512
    %v516 = vmul.f32 1.0, %v515
    %517 = vst [vmem:[%s2] sm:$0x1] %v516
    // Predicated region
    $region18: #{_fitness_jit.1} parent=1 // pred_check
      _
    $region19: #{_fitness_jit.1} parent=1 // pred_check_branch
      %519 = sbr.rel (0) target = $region21
    $region20: #{_fitness_jit.1} parent=1 // pred_region
      _
    $region21: #{_fitness_jit.1} parent=1 // pred_fallthru
      _
    // Predicated region
    $region22: #{_fitness_jit.1} parent=1 // pred_check
      _
    $region23: #{_fitness_jit.1} parent=1 // pred_check_branch
      %521 = sbr.rel (0) target = $region25
    $region24: #{_fitness_jit.1} parent=1 // pred_region
      _
    $region25: #{_fitness_jit.1} parent=1 // pred_fallthru
      _
    %522 = vsyncpa [#allocation3], 1
    %523 = vsyncpa [#allocation5], 1

</llo_original>
